<compile_context>
chip_gen: v5e
topology: v5e:2x2
jax: 0.10.0
libtpu: 0.0.40
codegen_flags: <defaults>
</compile_context>

<pallas_src>
import jax
import jax.numpy as jnp
from jax.experimental import pallas as pl
from jax.experimental.pallas import tpu as pltpu

# Deterministic "cfg" values (pycls ImageNet defaults, RGB order, BGR=False).
CFG_MEAN = [0.485, 0.456, 0.406]
CFG_STD = [0.229, 0.224, 0.225]

_LANE = 128


def _denorm_kernel(x_ref, scale_ref, shift_ref, o_ref):
    # x_ref / o_ref: (block_rows, block_cols); scale/shift: (block_rows, 1).
    o_ref[...] = (x_ref[...] * scale_ref[...] + shift_ref[...]).astype(o_ref.dtype)


def _round_up(x, m):
    return (x + m - 1) // m * m


def _budget_and_multicore():
    """Per-pipeline-buffer byte budget + whether to target a 2-TC chip."""
    kind = ""
    try:
        kind = jax.devices()[0].device_kind.lower()
    except Exception:
        pass
    if "v5" in kind:
        return 4 << 20, False   # v5e: ~0.8 TB/s; modest tiles already near roofline
    if "v6" in kind:
        return 6 << 20, False   # v6e: single TC, 128 MiB VMEM
    if "7" in kind:
        return 8 << 20, True    # v7x: 2 TCs, 64 MiB VMEM, ~3.2 TB/s
    return 4 << 20, False       # unknown backend: conservative default


def denormalize(x, mean=CFG_MEAN, std=CFG_STD):
    """x: (N, C, H, W) float array; out[n,c] = x[n,c] * std[c] + mean[c]."""
    N, C, H, W = x.shape
    dtype = x.dtype
    itemsize = jnp.dtype(dtype).itemsize
    rows, cols = N * C, H * W

    # Per-row scale/shift matching the (N*C, H*W) reshape's row order.
    scale_rows = jnp.tile(jnp.asarray(std, dtype=dtype), N).reshape(rows, 1)
    shift_rows = jnp.tile(jnp.asarray(mean, dtype=dtype), N).reshape(rows, 1)
    x2 = x.reshape(rows, cols)

    budget, multicore = _budget_and_multicore()
    sub = max(8, 32 // itemsize)  # sublane multiple: 8 f32, 16 bf16, 32 int8
    row_bytes = cols * itemsize
    min_block_rows = rows if rows < sub else sub

    if min_block_rows * row_bytes <= budget:
        # ---- Row tiling: contiguous (row_tile, H*W) blocks, no padding. ----
        if rows * row_bytes <= budget:
            row_tile = rows
        else:
            row_tile = max(sub, (budget // row_bytes) // sub * sub)
        if multicore and rows >= 2 * sub:
            # v7x: prefer an even grid >= 2 so both TCs get equal halves.
            steps = pl.cdiv(rows, row_tile)
            if steps < 2 or steps % 2 == 1:
                target = 2 if steps < 2 else steps + 1
                row_tile = max(sub, _round_up(pl.cdiv(rows, target), sub))
        grid = (pl.cdiv(rows, row_tile),)  # ragged tail (if any) masked by Pallas
        block = (row_tile, cols)
        in_specs = [
            pl.BlockSpec(block, lambda i: (i, 0)),
            pl.BlockSpec((row_tile, 1), lambda i: (i, 0)),
            pl.BlockSpec((row_tile, 1), lambda i: (i, 0)),
        ]
        out_specs = pl.BlockSpec(block, lambda i: (i, 0))
    else:
        # ---- Column tiling fallback: a single 8-row slab of H*W is too big. ----
        max_tile = max(_LANE, (budget // max(rows * itemsize, 1)) // _LANE * _LANE)
        max_tile = min(max_tile, _round_up(cols, _LANE))
        tile_cols = max_tile  # ragged last block handled by Pallas masking
        if cols % _LANE == 0:
            # Prefer a 128-aligned divisor of cols so every block is full/unmasked.
            c128 = cols // _LANE
            d = max_tile // _LANE
            while d > 1 and c128 % d != 0:
                d -= 1
            if c128 % d == 0 and d * _LANE * 4 >= max_tile:
                tile_cols = d * _LANE
        grid = (pl.cdiv(cols, tile_cols),)
        block = (rows, tile_cols)
        in_specs = [
            pl.BlockSpec(block, lambda j: (0, j)),
            pl.BlockSpec((rows, 1), lambda j: (0, 0)),  # resident across grid
            pl.BlockSpec((rows, 1), lambda j: (0, 0)),  # resident across grid
        ]
        out_specs = pl.BlockSpec(block, lambda j: (0, j))

    tile_bytes = block[0] * block[1] * itemsize
    # 2x in + 2x out double buffers + scale/shift buffers + headroom.
    vmem_limit = int(
        max(4 * tile_bytes + 8 * block[0] * itemsize + (2 << 20), 16 << 20)
    )

    out2 = pl.pallas_call(
        _denorm_kernel,
        out_shape=jax.ShapeDtypeStruct((rows, cols), dtype),
        grid=grid,
        in_specs=in_specs,
        out_specs=out_specs,
        input_output_aliases={0: 0},  # in-place: out2 may reuse x2's buffer
        compiler_params=pltpu.CompilerParams(
            dimension_semantics=("parallel",),
            vmem_limit_bytes=vmem_limit,
        ),
        cost_estimate=pl.CostEstimate(
            flops=2 * rows * cols,
            transcendentals=0,
            bytes_accessed=2 * rows * cols * itemsize + 4 * rows * itemsize,
        ),
    )(x2, scale_rows, shift_rows)

    return out2.reshape(N, C, H, W)


if __name__ == "__main__":
    key = jax.random.PRNGKey(0)
    N, C, H, W = 2, 3, 16, 16  # DenormalizeLayer is defined for 3-channel images
    x = jax.random.normal(key, (N, C, H, W), dtype=jnp.float32)

    # Reference (plain JAX), computed before the kernel call.
    std = jnp.asarray(CFG_STD, jnp.float32).reshape(1, C, 1, 1)
    mean = jnp.asarray(CFG_MEAN, jnp.float32).reshape(1, C, 1, 1)
    ref = x * std + mean

    out = jax.block_until_ready(denormalize(x))

    assert out.shape == x.shape and out.dtype == x.dtype
    assert jnp.allclose(out, ref, atol=1e-6, rtol=1e-6), "mismatch vs reference"
    print("KERNEL_OK")
</pallas_src>

<mosaic_0001>
module attributes {stable_mosaic.version = 11 : i64} {
  func.func @_denorm_kernel(%arg0: i32, %arg1: memref<6x256xf32, #tpu.memory_space<vmem>>, %arg2: memref<6x1xf32, #tpu.memory_space<vmem>>, %arg3: memref<6x1xf32, #tpu.memory_space<vmem>>, %arg4: memref<6x256xf32, #tpu.memory_space<vmem>>) attributes {dimension_semantics = [#tpu.dimension_semantics<parallel>], iteration_bounds = array<i64: 1>, scalar_prefetch = 0 : i64, scratch_operands = 0 : i64, tpu.core_type = #tpu.core_type<tc>, window_params = [{transform_indices = @transform_0, window_bounds = array<i64: 6, 256>}, {transform_indices = @transform_1, window_bounds = array<i64: 6, 1>}, {transform_indices = @transform_2, window_bounds = array<i64: 6, 1>}, {transform_indices = @transform_3, window_bounds = array<i64: 6, 256>}]} {
    %c0 = arith.constant 0 : index
    %c0_0 = arith.constant 0 : index
    %0 = vector.load %arg1[%c0, %c0_0] : memref<6x256xf32, #tpu.memory_space<vmem>>, vector<6x256xf32>
    %c0_1 = arith.constant 0 : index
    %c0_2 = arith.constant 0 : index
    %1 = vector.load %arg2[%c0_1, %c0_2] : memref<6x1xf32, #tpu.memory_space<vmem>>, vector<6x1xf32>
    %2 = vector.broadcast %1 : vector<6x1xf32> to vector<6x256xf32>
    %3 = arith.mulf %0, %2 : vector<6x256xf32>
    %c0_3 = arith.constant 0 : index
    %c0_4 = arith.constant 0 : index
    %4 = vector.load %arg3[%c0_3, %c0_4] : memref<6x1xf32, #tpu.memory_space<vmem>>, vector<6x1xf32>
    %5 = vector.broadcast %4 : vector<6x1xf32> to vector<6x256xf32>
    %6 = arith.addf %3, %5 : vector<6x256xf32>
    %c0_5 = arith.constant 0 : index
    %c0_6 = arith.constant 0 : index
    %7 = vector.load %arg4[%c0_5, %c0_6] : memref<6x256xf32, #tpu.memory_space<vmem>>, vector<6x256xf32>
    tpu.vector_store %arg4[%c0_5, %c0_6], %6 {strides = array<i32>} : memref<6x256xf32, #tpu.memory_space<vmem>>, vector<6x256xf32>,
    return
  }
  func.func @transform_0(%arg0: i32) -> (i32, i32) {
    %c0_i32 = arith.constant 0 : i32
    %c0_i32_0 = arith.constant 0 : i32
    return %arg0, %c0_i32 : i32, i32
  }
  func.func @transform_1(%arg0: i32) -> (i32, i32) {
    %c0_i32 = arith.constant 0 : i32
    %c0_i32_0 = arith.constant 0 : i32
    return %arg0, %c0_i32 : i32, i32
  }
  func.func @transform_2(%arg0: i32) -> (i32, i32) {
    %c0_i32 = arith.constant 0 : i32
    %c0_i32_0 = arith.constant 0 : i32
    return %arg0, %c0_i32 : i32, i32
  }
  func.func @transform_3(%arg0: i32) -> (i32, i32) {
    %c0_i32 = arith.constant 0 : i32
    %c0_i32_0 = arith.constant 0 : i32
    return %arg0, %c0_i32 : i32, i32
  }
}

</mosaic_0001>

<llo_original>
// kernel: tpu_custom_call.1
$region0: #{tpu_custom_call.1}
  #allocation0 [shape = 'u32[]', space=smem, size = 0x4, offset = 0x4, fixed_abs, tag = 'smem constant byte address 0x4 - core index']
  #allocation1 [shape = 'u32[72,128]{1,0:T(1,128)}', space=vmem, size = 0x9000, scoped, tag = 'internal scratch']
  %s0 = inlined_call_operand.hbm [shape: f32[6,256], index: 0, kind: input, shape index: {}, may-alias: {0,3}]
  %s1 = inlined_call_operand.vmem [shape: f32[6,1], index: 1, kind: input, shape index: {}]
  %s2 = inlined_call_operand.vmem [shape: f32[6,1], index: 2, kind: input, shape index: {}]
  %s3 = inlined_call_operand.hbm [shape: f32[6,256], index: 3, kind: output, shape index: {}, may-alias: {0,3}]
  %s4 = sld [smem:[#allocation0]]
  $region26: #{tpu_custom_call.1} parent=0
    _
  %s6 = ssub.s32 1, %s4
  %s7 = scalar_select 0, %s6, %s4
  $region1: #{tpu_custom_call.1} parent=0
    #allocation2 [shape = 'u8[8192]{0}', space=vmem, size = 0x2000, scoped, tag = 'input window, operand 0, single buffered']
    #allocation3 [shape = 's32[1]{0}', space=sflag, size = 0x4, scoped, tag = 'scoped memory for tpu_custom_call.1']
    #allocation4 [shape = 's32[1]{0}', space=sflag, size = 0x4, scoped, tag = 'scoped memory for tpu_custom_call.1']
    #allocation5 [shape = 'u8[8192]{0}', space=vmem, size = 0x2000, scoped, tag = 'output window, operand 0, single buffered']
    %8 = vsyncpa [#allocation3], 0
    %9 = vsyncpa [#allocation4], 0
    // Predicated region
    $region2: #{tpu_custom_call.1} parent=1 // pred_check
      _
    $region3: #{tpu_custom_call.1} parent=1 // pred_check_branch
      %11 = sbr.rel (0) target = $region5
    $region4: #{tpu_custom_call.1} parent=1 // pred_region
      %13 = vsyncadd [#allocation3], 0
      %s15 = sshll.u32 %s0, 4
      %s16 = int_to_ptr.hbm [resolvable:$true] %s15
      %s17 = sshll.u32 [#allocation2], 4
      %s18 = int_to_ptr.vmem [resolvable:$true] %s17
      %20 = dma.hbm_to_vmem [thread:$0]  %s16, 256, %s18, [#allocation3]
    $region5: #{tpu_custom_call.1} parent=1 // pred_fallthru
      _
    // Predicated region
    $region6: #{tpu_custom_call.1} parent=1 // pred_check
      _
    $region7: #{tpu_custom_call.1} parent=1 // pred_check_branch
      %22 = sbr.rel (0) target = $region9
    $region8: #{tpu_custom_call.1} parent=1 // pred_region
      _
    $region9: #{tpu_custom_call.1} parent=1 // pred_fallthru
      _
    // Predicated region
    $region10: #{tpu_custom_call.1} parent=1 // pred_check
      _
    $region11: #{tpu_custom_call.1} parent=1 // pred_check_branch
      %24 = sbr.rel (0) target = $region13
    $region12: #{tpu_custom_call.1} parent=1 // pred_region
      _
    $region13: #{tpu_custom_call.1} parent=1 // pred_fallthru
      _
    // Predicated region
    $region14: #{tpu_custom_call.1} parent=1 // pred_check
      _
    $region15: #{tpu_custom_call.1} parent=1 // pred_check_branch
      %26 = sbr.rel (0) target = $region17
    $region16: #{tpu_custom_call.1} parent=1 // pred_region
      %28 = dma.done [#allocation3], 256
    $region17: #{tpu_custom_call.1} parent=1 // pred_fallthru
      _
    %v29 = vld [vmem:[#allocation2] sm:$0x3f]
    %v30 = vld [vmem:[#allocation2 + $0x8] sm:$0x3f]
    %v31 = vld [vmem:[%s1] sm:$0x3f]
    %33 = vset.pattern.permute.xlu0 0
    %34 = vperm.xlu0 %33, %v31
    %v35 = vpop.permute.xlu0 %34
    %v37 = vmul.f32 %v29, %v35
    %v38 = vmul.f32 %v30, %v35
    %v39 = vld [vmem:[%s2] sm:$0x3f]
    %41 = vset.pattern.permute.xlu0 0
    %42 = vperm.xlu0 %41, %v39
    %v43 = vpop.permute.xlu0 %42
    %v45 = vadd.f32 %v37, %v43
    %v46 = vadd.f32 %v38, %v43
    %47 = vst [vmem:[#allocation5] sm:$0x3f] %v45
    %48 = vst [vmem:[#allocation5 + $0x8] sm:$0x3f] %v46
    // Predicated region
    $region18: #{tpu_custom_call.1} parent=1 // pred_check
      _
    $region19: #{tpu_custom_call.1} parent=1 // pred_check_branch
      %50 = sbr.rel (0) target = $region21
    $region20: #{tpu_custom_call.1} parent=1 // pred_region
      %52 = vsyncadd [#allocation4], 0
      %s54 = sshll.u32 [#allocation5], 4
      %s55 = int_to_ptr.vmem [resolvable:$true] %s54
      %s56 = sshll.u32 %s3, 4
      %s57 = int_to_ptr.hbm [resolvable:$true] %s56
      %59 = dma.vmem_to_hbm [thread:$0]  %s55, 256, %s57, [#allocation4]
    $region21: #{tpu_custom_call.1} parent=1 // pred_fallthru
      _
    // Predicated region
    $region22: #{tpu_custom_call.1} parent=1 // pred_check
      _
    $region23: #{tpu_custom_call.1} parent=1 // pred_check_branch
      %61 = sbr.rel (0) target = $region25
    $region24: #{tpu_custom_call.1} parent=1 // pred_region
      %63 = dma.done [#allocation4], 256
    $region25: #{tpu_custom_call.1} parent=1 // pred_fallthru
      _
    %64 = vsyncpa [#allocation3], 1
    %65 = vsyncpa [#allocation4], 1

</llo_original>
